<compile_context>
chip_gen: v7x
topology: tpu7x:2x2x1
jax: 0.10.0
libtpu: 0.0.40
codegen_flags: <defaults>
</compile_context>

<pallas_src>
import jax
import jax.numpy as jnp
from jax.experimental import pallas as pl
from jax.experimental.pallas import tpu as pltpu

EPS = 1e-5

IN_F = 87       # input features
HID = 150       # hidden width
K_PAD = 128     # padded input features
H_PAD = 256     # padded hidden width
O_PAD = 128     # padded output width (lane-dense store; col 0 is the logit)
TM_MAX = 512    # max batch tile (VMEM-safe even on v7x's 64 MiB / 32 MiB scoped)


def _round_up(x, m):
    return (x + m - 1) // m * m


def _mlp_kernel(x_ref, w1_ref, b1_ref, w2_ref, b2_ref, w3_ref, b3_ref, o_ref):
    # layer_1 + ReLU   (BN1 is already folded into w2/b2)
    h = jnp.dot(x_ref[...], w1_ref[...],
                preferred_element_type=jnp.float32) + b1_ref[...]
    h = jnp.maximum(h, 0.0).astype(jnp.bfloat16)

    # layer_2 + ReLU   (BN2 is already folded into w3/b3)
    h = jnp.dot(h, w2_ref[...],
                preferred_element_type=jnp.float32) + b2_ref[...]
    h = jnp.maximum(h, 0.0).astype(jnp.bfloat16)

    # dropout(p=0.1) is identity in eval mode; layer_out
    o_ref[...] = jnp.dot(h, w3_ref[...],
                         preferred_element_type=jnp.float32) + b3_ref[...]


@jax.jit
def binary_classification_forward(x, folded_params):
    """x: (N, 87) float32. Returns (N, 1) float32 logits (eval-mode forward)."""
    w1p, b1p, w2p, b2p, w3p, b3p = folded_params

    n = x.shape[0]
    tm = min(TM_MAX, _round_up(n, 8))
    n_pad = _round_up(n, tm)

    # Pad x to a lane-aligned bf16 slab (zeros in padded rows/cols are inert).
    xp = jnp.zeros((n_pad, K_PAD), jnp.bfloat16)
    xp = xp.at[:n, :IN_F].set(x.astype(jnp.bfloat16))

    cost = pl.CostEstimate(
        flops=2 * n_pad * (K_PAD * H_PAD + H_PAD * H_PAD + H_PAD * O_PAD),
        transcendentals=0,
        bytes_accessed=(xp.size * 2 + n_pad * O_PAD * 4
                        + (w1p.size + w2p.size + w3p.size) * 2
                        + (b1p.size + b2p.size + b3p.size) * 4),
    )

    out_pad = pl.pallas_call(
        _mlp_kernel,
        out_shape=jax.ShapeDtypeStruct((n_pad, O_PAD), jnp.float32),
        grid_spec=pltpu.PrefetchScalarGridSpec(
            num_scalar_prefetch=0,
            grid=(n_pad // tm,),
            in_specs=[
                pl.BlockSpec((tm, K_PAD), lambda i: (i, 0)),     # x tile
                pl.BlockSpec((K_PAD, H_PAD), lambda i: (0, 0)),  # w1 (resident)
                pl.BlockSpec((1, H_PAD), lambda i: (0, 0)),      # b1
                pl.BlockSpec((H_PAD, H_PAD), lambda i: (0, 0)),  # w2 (BN1 folded)
                pl.BlockSpec((1, H_PAD), lambda i: (0, 0)),      # b2 (BN1 folded)
                pl.BlockSpec((H_PAD, O_PAD), lambda i: (0, 0)),  # w3 (BN2 folded)
                pl.BlockSpec((1, O_PAD), lambda i: (0, 0)),      # b3 (BN2 folded)
            ],
            out_specs=pl.BlockSpec((tm, O_PAD), lambda i: (i, 0)),
        ),
        compiler_params=pltpu.CompilerParams(
            dimension_semantics=("parallel",)),
        cost_estimate=cost,
    )(xp, w1p, b1p, w2p, b2p, w3p, b3p)

    return out_pad[:n, :1]


def fold_and_pad_params(params):
    """Fold eval-mode BatchNorm into the following Linear layer and zero-pad
    everything to lane-aligned shapes. Weights -> bf16, biases stay f32."""
    (w1, b1, g1, be1, rm1, rv1,
     w2, b2, g2, be2, rm2, rv2,
     w3, b3) = params

    scale1 = g1 * jax.lax.rsqrt(rv1 + EPS)       # (1, 150)
    shift1 = be1 - rm1 * scale1
    scale2 = g2 * jax.lax.rsqrt(rv2 + EPS)
    shift2 = be2 - rm2 * scale2

    # BN1 folded into layer_2:  (relu1 * scale1 + shift1) @ W2 + b2
    w2f = w2 * scale1.reshape(-1, 1)
    b2f = b2 + shift1 @ w2
    # BN2 folded into layer_out
    w3f = w3 * scale2.reshape(-1, 1)
    b3f = b3 + shift2 @ w3

    w1p = jnp.zeros((K_PAD, H_PAD), jnp.float32).at[:IN_F, :HID].set(w1)
    b1p = jnp.zeros((1, H_PAD), jnp.float32).at[:, :HID].set(b1)
    w2p = jnp.zeros((H_PAD, H_PAD), jnp.float32).at[:HID, :HID].set(w2f)
    b2p = jnp.zeros((1, H_PAD), jnp.float32).at[:, :HID].set(b2f)
    w3p = jnp.zeros((H_PAD, O_PAD), jnp.float32).at[:HID, :1].set(w3f)
    b3p = jnp.zeros((1, O_PAD), jnp.float32).at[:, :1].set(b3f)

    return (w1p.astype(jnp.bfloat16), b1p,
            w2p.astype(jnp.bfloat16), b2p,
            w3p.astype(jnp.bfloat16), b3p)


def _linear_init(key, fan_in, fan_out):
    """Deterministic init mimicking PyTorch Linear: U(-1/sqrt(fan_in), +)."""
    kw, kb = jax.random.split(key)
    bound = 1.0 / jnp.sqrt(float(fan_in))
    w = jax.random.uniform(kw, (fan_in, fan_out), jnp.float32, -bound, bound)
    b = jax.random.uniform(kb, (1, fan_out), jnp.float32, -bound, bound)
    return w, b


def make_params(key):
    k1, k2, k3, k4, k5 = jax.random.split(key, 5)
    w1, b1 = _linear_init(k1, IN_F, HID)
    w2, b2 = _linear_init(k2, HID, HID)
    w3, b3 = _linear_init(k3, HID, 1)

    # BatchNorm1d(150): perturb gamma/beta deterministically so they matter;
    # running stats kept at the PyTorch-init values but handled generally.
    g1 = 1.0 + 0.1 * jax.random.normal(k4, (1, HID), jnp.float32)
    be1 = 0.1 * jax.random.normal(jax.random.fold_in(k4, 1), (1, HID), jnp.float32)
    rm1 = jnp.zeros((1, HID), jnp.float32)
    rv1 = jnp.ones((1, HID), jnp.float32)

    g2 = 1.0 + 0.1 * jax.random.normal(k5, (1, HID), jnp.float32)
    be2 = 0.1 * jax.random.normal(jax.random.fold_in(k5, 1), (1, HID), jnp.float32)
    rm2 = jnp.zeros((1, HID), jnp.float32)
    rv2 = jnp.ones((1, HID), jnp.float32)

    return (w1, b1, g1, be1, rm1, rv1,
            w2, b2, g2, be2, rm2, rv2,
            w3, b3)


def _reference(x, params):
    """Full-precision eval-mode reference (matches the PyTorch module math)."""
    (w1, b1, g1, be1, rm1, rv1,
     w2, b2, g2, be2, rm2, rv2,
     w3, b3) = params
    h = jnp.maximum(x @ w1 + b1, 0.0)
    h = (h - rm1) / jnp.sqrt(rv1 + EPS) * g1 + be1
    h = jnp.maximum(h @ w2 + b2, 0.0)
    h = (h - rm2) / jnp.sqrt(rv2 + EPS) * g2 + be2
    return h @ w3 + b3


def _reference_folded(x, folded):
    """Dtype-matched reference: same folding / padding / bf16 casts as kernel."""
    w1p, b1p, w2p, b2p, w3p, b3p = folded
    xq = jnp.zeros((x.shape[0], K_PAD), jnp.float32).at[:, :IN_F].set(x)
    xq = xq.astype(jnp.bfloat16).astype(jnp.float32)
    h = jnp.maximum(xq @ w1p.astype(jnp.float32) + b1p, 0.0)
    h = h.astype(jnp.bfloat16).astype(jnp.float32)
    h = jnp.maximum(h @ w2p.astype(jnp.float32) + b2p, 0.0)
    h = h.astype(jnp.bfloat16).astype(jnp.float32)
    out = h @ w3p.astype(jnp.float32) + b3p
    return out[:, :1]


if __name__ == "__main__":
    key = jax.random.PRNGKey(0)
    kx, kp = jax.random.split(key)

    batch = 8
    x = jax.random.normal(kx, (batch, IN_F), jnp.float32)
    params = make_params(kp)
    folded = fold_and_pad_params(params)

    out = binary_classification_forward(x, folded)
    out = jax.block_until_ready(out)
    assert out.shape == (batch, 1)

    # Tight check vs a dtype-matched reference (same folding / padding / bf16).
    ref_matched = _reference_folded(x, folded)
    assert jnp.allclose(out, ref_matched, atol=1e-3, rtol=1e-3), \
        "mismatch vs dtype-matched reference"

    # Semantics check vs the full-precision eval-mode PyTorch math
    # (loose tolerance accounts for bf16 operand quantization).
    ref_f32 = _reference(x, params)
    assert jnp.allclose(out, ref_f32, atol=1e-1, rtol=1e-1), \
        "mismatch vs f32 eval-mode reference"

    print("KERNEL_OK")
</pallas_src>

<mosaic_0001>
module attributes {stable_mosaic.version = 11 : i64} {
  func.func @_mlp_kernel(%arg0: i32, %arg1: memref<8x128xbf16, #tpu.memory_space<vmem>>, %arg2: memref<128x256xbf16, #tpu.memory_space<vmem>>, %arg3: memref<1x256xf32, #tpu.memory_space<vmem>>, %arg4: memref<256x256xbf16, #tpu.memory_space<vmem>>, %arg5: memref<1x256xf32, #tpu.memory_space<vmem>>, %arg6: memref<256x128xbf16, #tpu.memory_space<vmem>>, %arg7: memref<1x128xf32, #tpu.memory_space<vmem>>, %arg8: memref<8x128xf32, #tpu.memory_space<vmem>>) attributes {dimension_semantics = [#tpu.dimension_semantics<parallel>], iteration_bounds = array<i64: 1>, scalar_prefetch = 0 : i64, scratch_operands = 0 : i64, tpu.core_type = #tpu.core_type<tc>, window_params = [{transform_indices = @transform_0, window_bounds = array<i64: 8, 128>}, {pipeline_mode = #tpu.pipeline_mode<synchronous>, transform_indices = @transform_1, window_bounds = array<i64: 128, 256>}, {pipeline_mode = #tpu.pipeline_mode<synchronous>, transform_indices = @transform_2, window_bounds = array<i64: 1, 256>}, {pipeline_mode = #tpu.pipeline_mode<synchronous>, transform_indices = @transform_3, window_bounds = array<i64: 256, 256>}, {pipeline_mode = #tpu.pipeline_mode<synchronous>, transform_indices = @transform_4, window_bounds = array<i64: 1, 256>}, {pipeline_mode = #tpu.pipeline_mode<synchronous>, transform_indices = @transform_5, window_bounds = array<i64: 256, 128>}, {pipeline_mode = #tpu.pipeline_mode<synchronous>, transform_indices = @transform_6, window_bounds = array<i64: 1, 128>}, {transform_indices = @transform_7, window_bounds = array<i64: 8, 128>}]} {
    %c0 = arith.constant 0 : index
    %c0_0 = arith.constant 0 : index
    %0 = vector.load %arg1[%c0, %c0_0] : memref<8x128xbf16, #tpu.memory_space<vmem>>, vector<8x128xbf16>
    %c0_1 = arith.constant 0 : index
    %c0_2 = arith.constant 0 : index
    %1 = vector.load %arg2[%c0_1, %c0_2] : memref<128x256xbf16, #tpu.memory_space<vmem>>, vector<128x256xbf16>
    %cst = arith.constant dense<0.000000e+00> : vector<8x256xf32>
    %2 = tpu.matmul %0, %1, %cst {dimension_numbers = #tpu.dot_dimension_numbers<[1], [0], [0], [1], [0, 0, 1, 1], [], []>} : vector<8x128xbf16>, vector<128x256xbf16>, vector<8x256xf32> -> vector<8x256xf32>
    %c0_3 = arith.constant 0 : index
    %c0_4 = arith.constant 0 : index
    %3 = vector.load %arg3[%c0_3, %c0_4] : memref<1x256xf32, #tpu.memory_space<vmem>>, vector<1x256xf32>
    %4 = vector.broadcast %3 : vector<1x256xf32> to vector<8x256xf32>
    %5 = arith.addf %2, %4 : vector<8x256xf32>
    %cst_5 = arith.constant 0.000000e+00 : f32
    %6 = vector.broadcast %cst_5 : f32 to vector<8x256xf32>
    %7 = arith.maximumf %5, %6 : vector<8x256xf32>
    %8 = arith.truncf %7 : vector<8x256xf32> to vector<8x256xbf16>
    %c0_6 = arith.constant 0 : index
    %c0_7 = arith.constant 0 : index
    %9 = vector.load %arg4[%c0_6, %c0_7] : memref<256x256xbf16, #tpu.memory_space<vmem>>, vector<256x256xbf16>
    %cst_8 = arith.constant dense<0.000000e+00> : vector<8x256xf32>
    %10 = tpu.matmul %8, %9, %cst_8 {dimension_numbers = #tpu.dot_dimension_numbers<[1], [0], [0], [1], [0, 0, 1, 1], [], []>} : vector<8x256xbf16>, vector<256x256xbf16>, vector<8x256xf32> -> vector<8x256xf32>
    %c0_9 = arith.constant 0 : index
    %c0_10 = arith.constant 0 : index
    %11 = vector.load %arg5[%c0_9, %c0_10] : memref<1x256xf32, #tpu.memory_space<vmem>>, vector<1x256xf32>
    %12 = vector.broadcast %11 : vector<1x256xf32> to vector<8x256xf32>
    %13 = arith.addf %10, %12 : vector<8x256xf32>
    %cst_11 = arith.constant 0.000000e+00 : f32
    %14 = vector.broadcast %cst_11 : f32 to vector<8x256xf32>
    %15 = arith.maximumf %13, %14 : vector<8x256xf32>
    %16 = arith.truncf %15 : vector<8x256xf32> to vector<8x256xbf16>
    %c0_12 = arith.constant 0 : index
    %c0_13 = arith.constant 0 : index
    %17 = vector.load %arg6[%c0_12, %c0_13] : memref<256x128xbf16, #tpu.memory_space<vmem>>, vector<256x128xbf16>
    %cst_14 = arith.constant dense<0.000000e+00> : vector<8x128xf32>
    %18 = tpu.matmul %16, %17, %cst_14 {dimension_numbers = #tpu.dot_dimension_numbers<[1], [0], [0], [1], [0, 0, 1, 1], [], []>} : vector<8x256xbf16>, vector<256x128xbf16>, vector<8x128xf32> -> vector<8x128xf32>
    %c0_15 = arith.constant 0 : index
    %c0_16 = arith.constant 0 : index
    %19 = vector.load %arg7[%c0_15, %c0_16] : memref<1x128xf32, #tpu.memory_space<vmem>>, vector<1x128xf32>
    %20 = vector.broadcast %19 : vector<1x128xf32> to vector<8x128xf32>
    %21 = arith.addf %18, %20 : vector<8x128xf32>
    %c0_17 = arith.constant 0 : index
    %c0_18 = arith.constant 0 : index
    %22 = vector.load %arg8[%c0_17, %c0_18] : memref<8x128xf32, #tpu.memory_space<vmem>>, vector<8x128xf32>
    tpu.vector_store %arg8[%c0_17, %c0_18], %21 {strides = array<i32>} : memref<8x128xf32, #tpu.memory_space<vmem>>, vector<8x128xf32>,
    return
  }
  func.func @transform_0(%arg0: i32) -> (i32, i32) {
    %c0_i32 = arith.constant 0 : i32
    %c0_i32_0 = arith.constant 0 : i32
    return %arg0, %c0_i32 : i32, i32
  }
  func.func @transform_1(%arg0: i32) -> (i32, i32) {
    %c0_i32 = arith.constant 0 : i32
    %c0_i32_0 = arith.constant 0 : i32
    %c0_i32_1 = arith.constant 0 : i32
    return %c0_i32, %c0_i32_0 : i32, i32
  }
  func.func @transform_2(%arg0: i32) -> (i32, i32) {
    %c0_i32 = arith.constant 0 : i32
    %c0_i32_0 = arith.constant 0 : i32
    %c0_i32_1 = arith.constant 0 : i32
    return %c0_i32, %c0_i32_0 : i32, i32
  }
  func.func @transform_3(%arg0: i32) -> (i32, i32) {
    %c0_i32 = arith.constant 0 : i32
    %c0_i32_0 = arith.constant 0 : i32
    %c0_i32_1 = arith.constant 0 : i32
    return %c0_i32, %c0_i32_0 : i32, i32
  }
  func.func @transform_4(%arg0: i32) -> (i32, i32) {
    %c0_i32 = arith.constant 0 : i32
    %c0_i32_0 = arith.constant 0 : i32
    %c0_i32_1 = arith.constant 0 : i32
    return %c0_i32, %c0_i32_0 : i32, i32
  }
  func.func @transform_5(%arg0: i32) -> (i32, i32) {
    %c0_i32 = arith.constant 0 : i32
    %c0_i32_0 = arith.constant 0 : i32
    %c0_i32_1 = arith.constant 0 : i32
    return %c0_i32, %c0_i32_0 : i32, i32
  }
  func.func @transform_6(%arg0: i32) -> (i32, i32) {
    %c0_i32 = arith.constant 0 : i32
    %c0_i32_0 = arith.constant 0 : i32
    %c0_i32_1 = arith.constant 0 : i32
    return %c0_i32, %c0_i32_0 : i32, i32
  }
  func.func @transform_7(%arg0: i32) -> (i32, i32) {
    %c0_i32 = arith.constant 0 : i32
    %c0_i32_0 = arith.constant 0 : i32
    return %arg0, %c0_i32 : i32, i32
  }
}

</mosaic_0001>

<llo_original>
// kernel: binary_classification_forward.1
$region0: #{binary_classification_forward.1}
  #allocation0 [shape = 'u32[]', space=smem, size = 0x4, offset = 0x4, fixed_abs, tag = 'smem constant byte address 0x4 - core index']
  #allocation1 [shape = 'u32[144,128]{1,0:T(1,128)}', space=vmem, size = 0x12000, scoped, tag = 'internal scratch']
  %s0 = inlined_call_operand.vmem [shape: bf16[8,128], index: 0, kind: input, shape index: {}]
  %s1 = inlined_call_operand.hbm [shape: bf16[128,256], index: 1, kind: input, shape index: {}]
  %s2 = inlined_call_operand.vmem [shape: f32[1,256], index: 2, kind: input, shape index: {}]
  %s3 = inlined_call_operand.hbm [shape: bf16[256,256], index: 3, kind: input, shape index: {}]
  %s4 = inlined_call_operand.vmem [shape: f32[1,256], index: 4, kind: input, shape index: {}]
  %s5 = inlined_call_operand.hbm [shape: bf16[256,128], index: 5, kind: input, shape index: {}]
  %s6 = inlined_call_operand.vmem [shape: f32[1,128], index: 6, kind: input, shape index: {}]
  %s7 = inlined_call_operand.vmem [shape: f32[8,128], index: 7, kind: output, shape index: {}]
  %s8 = sld [smem:[#allocation0]]
  $region50: #{binary_classification_forward.1} parent=0
    _
  %s10 = ssub.s32 1, %s8
  %s11 = scalar_select 0, %s10, %s8
  $region1: #{binary_classification_forward.1} parent=0
    #allocation2 [shape = 'u8[65536]{0}', space=vmem, size = 0x10000, scoped, tag = 'input window, operand 1, single buffered']
    #allocation3 [shape = 's32[1]{0}', space=sflag, size = 0x4, scoped, tag = 'scoped memory for binary_classification_forward.1']
    #allocation4 [shape = 'u8[131072]{0}', space=vmem, size = 0x20000, scoped, tag = 'input window, operand 3, single buffered']
    #allocation5 [shape = 's32[1]{0}', space=sflag, size = 0x4, scoped, tag = 'scoped memory for binary_classification_forward.1']
    #allocation6 [shape = 'u8[65536]{0}', space=vmem, size = 0x10000, scoped, tag = 'input window, operand 5, single buffered']
    %12 = vsyncpa [#allocation3], 0
    %13 = vsyncpa [#allocation5], 0
    // Predicated region
    $region2: #{binary_classification_forward.1} parent=1 // pred_check
      _
    $region3: #{binary_classification_forward.1} parent=1 // pred_check_branch
      %15 = sbr.rel (0) target = $region5
    $region4: #{binary_classification_forward.1} parent=1 // pred_region
      _
    $region5: #{binary_classification_forward.1} parent=1 // pred_fallthru
      _
    // Predicated region
    $region6: #{binary_classification_forward.1} parent=1 // pred_check
      _
    $region7: #{binary_classification_forward.1} parent=1 // pred_check_branch
      %17 = sbr.rel (0) target = $region9
    $region8: #{binary_classification_forward.1} parent=1 // pred_region
      %s19 = ssub.s32 2048, 2048
      %20 = vsyncadd [#allocation3], %s19
      %s21 = sshll.u32 [#allocation2], 4
      %s22 = int_to_ptr.vmem [resolvable:$true] %s21
      %27 = dma.hbm_to_vmem [thread:$0]  %s1, 2048, %s22, [#allocation3], 128, 128, 8
    $region9: #{binary_classification_forward.1} parent=1 // pred_fallthru
      _
    // Predicated region
    $region10: #{binary_classification_forward.1} parent=1 // pred_check
      _
    $region11: #{binary_classification_forward.1} parent=1 // pred_check_branch
      %29 = sbr.rel (0) target = $region13
    $region12: #{binary_classification_forward.1} parent=1 // pred_region
      _
    $region13: #{binary_classification_forward.1} parent=1 // pred_fallthru
      _
    // Predicated region
    $region14: #{binary_classification_forward.1} parent=1 // pred_check
      _
    $region15: #{binary_classification_forward.1} parent=1 // pred_check_branch
      %31 = sbr.rel (0) target = $region17
    $region16: #{binary_classification_forward.1} parent=1 // pred_region
      %s33 = ssub.s32 4096, 4096
      %34 = vsyncadd [#allocation5], %s33
      %s35 = sshll.u32 [#allocation4], 4
      %s36 = int_to_ptr.vmem [resolvable:$true] %s35
      %41 = dma.hbm_to_vmem [thread:$0]  %s3, 4096, %s36, [#allocation5], 128, 128, 8
    $region17: #{binary_classification_forward.1} parent=1 // pred_fallthru
      _
    // Predicated region
    $region18: #{binary_classification_forward.1} parent=1 // pred_check
      _
    $region19: #{binary_classification_forward.1} parent=1 // pred_check_branch
      %43 = sbr.rel (0) target = $region21
    $region20: #{binary_classification_forward.1} parent=1 // pred_region
      _
    $region21: #{binary_classification_forward.1} parent=1 // pred_fallthru
      _
    // Predicated region
    $region22: #{binary_classification_forward.1} parent=1 // pred_check
      _
    $region23: #{binary_classification_forward.1} parent=1 // pred_check_branch
      %45 = sbr.rel (0) target = $region25
    $region24: #{binary_classification_forward.1} parent=1 // pred_region
      %s47 = ssub.s32 2048, 2048
      %48 = vsyncadd [#allocation5], %s47
      %s49 = sshll.u32 [#allocation6], 4
      %s50 = int_to_ptr.vmem [resolvable:$true] %s49
      %55 = dma.hbm_to_vmem [thread:$0]  %s5, 2048, %s50, [#allocation5], 64, 64, 4
    $region25: #{binary_classification_forward.1} parent=1 // pred_fallthru
      _
    // Predicated region
    $region26: #{binary_classification_forward.1} parent=1 // pred_check
      _
    $region27: #{binary_classification_forward.1} parent=1 // pred_check_branch
      %57 = sbr.rel (0) target = $region29
    $region28: #{binary_classification_forward.1} parent=1 // pred_region
      _
    $region29: #{binary_classification_forward.1} parent=1 // pred_fallthru
      _
    // Predicated region
    $region30: #{binary_classification_forward.1} parent=1 // pred_check
      _
    $region31: #{binary_classification_forward.1} parent=1 // pred_check_branch
      %59 = sbr.rel (0) target = $region33
    $region32: #{binary_classification_forward.1} parent=1 // pred_region
      %60 = dma.done [#allocation3], 2048
    $region33: #{binary_classification_forward.1} parent=1 // pred_fallthru
      _
    // Predicated region
    $region34: #{binary_classification_forward.1} parent=1 // pred_check
      _
    $region35: #{binary_classification_forward.1} parent=1 // pred_check_branch
      %62 = sbr.rel (0) target = $region37
    $region36: #{binary_classification_forward.1} parent=1 // pred_region
      %63 = dma.done [#allocation5], 4096
    $region37: #{binary_classification_forward.1} parent=1 // pred_fallthru
      _
    // Predicated region
    $region38: #{binary_classification_forward.1} parent=1 // pred_check
      _
    $region39: #{binary_classification_forward.1} parent=1 // pred_check_branch
      %65 = sbr.rel (0) target = $region41
    $region40: #{binary_classification_forward.1} parent=1 // pred_region
      %66 = dma.done [#allocation5], 2048
    $region41: #{binary_classification_forward.1} parent=1 // pred_fallthru
      _
    %v68 = vld [vmem:[%s0] sm:$0xf]
    %v69 = vld [vmem:[#allocation2] sm:$0xff]
    %v70 = vld [vmem:[#allocation2 + $0x8] sm:$0xff]
    %v71 = vld [vmem:[#allocation2 + $0x10] sm:$0xff]
    %v72 = vld [vmem:[#allocation2 + $0x18] sm:$0xff]
    %v73 = vld [vmem:[#allocation2 + $0x20] sm:$0xff]
    %v74 = vld [vmem:[#allocation2 + $0x28] sm:$0xff]
    %v75 = vld [vmem:[#allocation2 + $0x30] sm:$0xff]
    %v76 = vld [vmem:[#allocation2 + $0x38] sm:$0xff]
    %v77 = vld [vmem:[#allocation2 + $0x40] sm:$0xff]
    %v78 = vld [vmem:[#allocation2 + $0x48] sm:$0xff]
    %v79 = vld [vmem:[#allocation2 + $0x50] sm:$0xff]
    %v80 = vld [vmem:[#allocation2 + $0x58] sm:$0xff]
    %v81 = vld [vmem:[#allocation2 + $0x60] sm:$0xff]
    %v82 = vld [vmem:[#allocation2 + $0x68] sm:$0xff]
    %v83 = vld [vmem:[#allocation2 + $0x70] sm:$0xff]
    %v84 = vld [vmem:[#allocation2 + $0x78] sm:$0xff]
    %v85 = vld [vmem:[%s2] sm:$0x3]
    %v87 = vlaneseq
    %v88 = vshrl.u32 %v87, 7
    %v89 = vsub.s32 0, %v88
    %v90 = vrot.slane %v85, %v89
    %v91 = vlaneseq
    %v92 = vshrl.u32 %v91, 7
    %v93 = vsub.s32 1, %v92
    %v94 = vrot.slane %v85, %v93
    %v113 = vunpack.c.l.b16 %v69
    %v114 = vunpack.c.h.b16 %v69
    %v115 = vunpack.c.l.b16 %v70
    %v116 = vunpack.c.h.b16 %v70
    %v117 = vunpack.c.l.b16 %v71
    %v118 = vunpack.c.h.b16 %v71
    %v119 = vunpack.c.l.b16 %v72
    %v120 = vunpack.c.h.b16 %v72
    %v121 = vunpack.c.l.b16 %v73
    %v122 = vunpack.c.h.b16 %v73
    %v123 = vunpack.c.l.b16 %v74
    %v124 = vunpack.c.h.b16 %v74
    %v125 = vunpack.c.l.b16 %v75
    %v126 = vunpack.c.h.b16 %v75
    %v127 = vunpack.c.l.b16 %v76
    %v128 = vunpack.c.h.b16 %v76
    %v129 = vunpack.c.l.b16 %v77
    %v130 = vunpack.c.h.b16 %v77
    %v131 = vunpack.c.l.b16 %v78
    %v132 = vunpack.c.h.b16 %v78
    %v133 = vunpack.c.l.b16 %v79
    %v134 = vunpack.c.h.b16 %v79
    %v135 = vunpack.c.l.b16 %v80
    %v136 = vunpack.c.h.b16 %v80
    %v137 = vunpack.c.l.b16 %v81
    %v138 = vunpack.c.h.b16 %v81
    %v139 = vunpack.c.l.b16 %v82
    %v140 = vunpack.c.h.b16 %v82
    %v141 = vunpack.c.l.b16 %v83
    %v142 = vunpack.c.h.b16 %v83
    %v143 = vunpack.c.l.b16 %v84
    %v144 = vunpack.c.h.b16 %v84
    %v145 = vpack.c.b16 %v115, %v113
    %v146 = vpack.c.b16 %v116, %v114
    %v147 = vpack.c.b16 %v119, %v117
    %v148 = vpack.c.b16 %v120, %v118
    %v149 = vpack.c.b16 %v123, %v121
    %v150 = vpack.c.b16 %v124, %v122
    %v151 = vpack.c.b16 %v127, %v125
    %v152 = vpack.c.b16 %v128, %v126
    %v153 = vpack.c.b16 %v131, %v129
    %v154 = vpack.c.b16 %v132, %v130
    %v155 = vpack.c.b16 %v135, %v133
    %v156 = vpack.c.b16 %v136, %v134
    %v157 = vpack.c.b16 %v139, %v137
    %v158 = vpack.c.b16 %v140, %v138
    %v159 = vpack.c.b16 %v143, %v141
    %v160 = vpack.c.b16 %v144, %v142
    %177 = vmatprep.subr.bf16.mxu0 %v146
    %178 = vmatpush1.bf16.msra.mxu0 %v145
    %179 = vmatprep.subr.bf16.mxu0 %v148
    %180 = vmatpush1.bf16.msra.mxu0 %v147
    %181 = vmatprep.subr.bf16.mxu0 %v150
    %182 = vmatpush1.bf16.msra.mxu0 %v149
    %183 = vmatprep.subr.bf16.mxu0 %v152
    %184 = vmatpush1.bf16.msra.mxu0 %v151
    %185 = vmatprep.subr.bf16.mxu0 %v154
    %186 = vmatpush1.bf16.msra.mxu0 %v153
    %187 = vmatprep.subr.bf16.mxu0 %v156
    %188 = vmatpush1.bf16.msra.mxu0 %v155
    %189 = vmatprep.subr.bf16.mxu0 %v158
    %190 = vmatpush1.bf16.msra.mxu0 %v157
    %191 = vmatprep.subr.bf16.mxu0 %v160
    %192 = vmatpush1.bf16.msra.mxu0 %v159
    %193 = vmatprep.subr.bf16.mxu0 0
    %194 = vmatpush1.bf16.msra.mxu0 0
    %195 = vmatprep.subr.bf16.mxu0 0
    %196 = vmatpush1.bf16.msra.mxu0 0
    %197 = vmatprep.subr.bf16.mxu0 0
    %198 = vmatpush1.bf16.msra.mxu0 0
    %199 = vmatprep.subr.bf16.mxu0 0
    %200 = vmatpush1.bf16.msra.mxu0 0
    %201 = vmatprep.subr.bf16.mxu0 0
    %202 = vmatpush1.bf16.msra.mxu0 0
    %203 = vmatprep.subr.bf16.mxu0 0
    %204 = vmatpush1.bf16.msra.mxu0 0
    %205 = vmatprep.subr.bf16.mxu0 0
    %206 = vmatpush1.bf16.msra.mxu0 0
    %207 = vmatprep.subr.bf16.mxu0 0
    %208 = vmatpush1.bf16.msra.mxu0 0
    %209 = vmatprep.mubr.bf16.mxu0 0
    %210 = vmatmul.mubr.bf16.gmra.mrb[0].mxu0 %v68
    %v211 = vpop.f32.mrb[0].mxu0
    %v212 = vadd.f32 %v90, %v211
    %v213 = vpop.f32.mrb[0].mxu0
    %v214 = vadd.f32 %v94, %v213
    %v215 = vpop.f32.mrb[0].mxu0
    %v216 = vpop.f32.mrb[0].mxu0
    %217 = vdwg.mxu0
    %v218 = vmax.f32 %v212, 0.0
    %v219 = vmax.f32 %v214, 0.0
    %v220 = vpack.c.bf16 %v218, %v218
    %v221 = vpack.c.bf16 %v219, %v219
    %v222 = vld [vmem:[#allocation4] sm:$0xff]
    %v223 = vld [vmem:[#allocation4 + $0x8] sm:$0xff]
    %v224 = vld [vmem:[#allocation4 + $0x10] sm:$0xff]
    %v225 = vld [vmem:[#allocation4 + $0x18] sm:$0xff]
    %v226 = vld [vmem:[#allocation4 + $0x20] sm:$0xff]
    %v227 = vld [vmem:[#allocation4 + $0x28] sm:$0xff]
    %v228 = vld [vmem:[#allocation4 + $0x30] sm:$0xff]
    %v229 = vld [vmem:[#allocation4 + $0x38] sm:$0xff]
    %v230 = vld [vmem:[#allocation4 + $0x40] sm:$0xff]
    %v231 = vld [vmem:[#allocation4 + $0x48] sm:$0xff]
    %v232 = vld [vmem:[#allocation4 + $0x50] sm:$0xff]
    %v233 = vld [vmem:[#allocation4 + $0x58] sm:$0xff]
    %v234 = vld [vmem:[#allocation4 + $0x60] sm:$0xff]
    %v235 = vld [vmem:[#allocation4 + $0x68] sm:$0xff]
    %v236 = vld [vmem:[#allocation4 + $0x70] sm:$0xff]
    %v237 = vld [vmem:[#allocation4 + $0x78] sm:$0xff]
    %v238 = vld [vmem:[#allocation4 + $0x80] sm:$0xff]
    %v239 = vld [vmem:[#allocation4 + $0x88] sm:$0xff]
    %v240 = vld [vmem:[#allocation4 + $0x90] sm:$0xff]
    %v241 = vld [vmem:[#allocation4 + $0x98] sm:$0xff]
    %v242 = vld [vmem:[#allocation4 + $0xa0] sm:$0xff]
    %v243 = vld [vmem:[#allocation4 + $0xa8] sm:$0xff]
    %v244 = vld [vmem:[#allocation4 + $0xb0] sm:$0xff]
    %v245 = vld [vmem:[#allocation4 + $0xb8] sm:$0xff]
    %v246 = vld [vmem:[#allocation4 + $0xc0] sm:$0xff]
    %v247 = vld [vmem:[#allocation4 + $0xc8] sm:$0xff]
    %v248 = vld [vmem:[#allocation4 + $0xd0] sm:$0xff]
    %v249 = vld [vmem:[#allocation4 + $0xd8] sm:$0xff]
    %v250 = vld [vmem:[#allocation4 + $0xe0] sm:$0xff]
    %v251 = vld [vmem:[#allocation4 + $0xe8] sm:$0xff]
    %v252 = vld [vmem:[#allocation4 + $0xf0] sm:$0xff]
    %v253 = vld [vmem:[#allocation4 + $0xf8] sm:$0xff]
    %v254 = vld [vmem:[%s4] sm:$0x3]
    %v256 = vlaneseq
    %v257 = vshrl.u32 %v256, 7
    %v258 = vsub.s32 0, %v257
    %v259 = vrot.slane %v254, %v258
    %v260 = vlaneseq
    %v261 = vshrl.u32 %v260, 7
    %v262 = vsub.s32 1, %v261
    %v263 = vrot.slane %v254, %v262
    %v298 = vunpack.c.l.b16 %v222
    %v299 = vunpack.c.h.b16 %v222
    %v300 = vunpack.c.l.b16 %v223
    %v301 = vunpack.c.h.b16 %v223
    %v302 = vunpack.c.l.b16 %v224
    %v303 = vunpack.c.h.b16 %v224
    %v304 = vunpack.c.l.b16 %v225
    %v305 = vunpack.c.h.b16 %v225
    %v306 = vunpack.c.l.b16 %v226
    %v307 = vunpack.c.h.b16 %v226
    %v308 = vunpack.c.l.b16 %v227
    %v309 = vunpack.c.h.b16 %v227
    %v310 = vunpack.c.l.b16 %v228
    %v311 = vunpack.c.h.b16 %v228
    %v312 = vunpack.c.l.b16 %v229
    %v313 = vunpack.c.h.b16 %v229
    %v314 = vunpack.c.l.b16 %v230
    %v315 = vunpack.c.h.b16 %v230
    %v316 = vunpack.c.l.b16 %v231
    %v317 = vunpack.c.h.b16 %v231
    %v318 = vunpack.c.l.b16 %v232
    %v319 = vunpack.c.h.b16 %v232
    %v320 = vunpack.c.l.b16 %v233
    %v321 = vunpack.c.h.b16 %v233
    %v322 = vunpack.c.l.b16 %v234
    %v323 = vunpack.c.h.b16 %v234
    %v324 = vunpack.c.l.b16 %v235
    %v325 = vunpack.c.h.b16 %v235
    %v326 = vunpack.c.l.b16 %v236
    %v327 = vunpack.c.h.b16 %v236
    %v328 = vunpack.c.l.b16 %v237
    %v329 = vunpack.c.h.b16 %v237
    %v330 = vunpack.c.l.b16 %v238
    %v331 = vunpack.c.h.b16 %v238
    %v332 = vunpack.c.l.b16 %v239
    %v333 = vunpack.c.h.b16 %v239
    %v334 = vunpack.c.l.b16 %v240
    %v335 = vunpack.c.h.b16 %v240
    %v336 = vunpack.c.l.b16 %v241
    %v337 = vunpack.c.h.b16 %v241
    %v338 = vunpack.c.l.b16 %v242
    %v339 = vunpack.c.h.b16 %v242
    %v340 = vunpack.c.l.b16 %v243
    %v341 = vunpack.c.h.b16 %v243
    %v342 = vunpack.c.l.b16 %v244
    %v343 = vunpack.c.h.b16 %v244
    %v344 = vunpack.c.l.b16 %v245
    %v345 = vunpack.c.h.b16 %v245
    %v346 = vunpack.c.l.b16 %v246
    %v347 = vunpack.c.h.b16 %v246
    %v348 = vunpack.c.l.b16 %v247
    %v349 = vunpack.c.h.b16 %v247
    %v350 = vunpack.c.l.b16 %v248
    %v351 = vunpack.c.h.b16 %v248
    %v352 = vunpack.c.l.b16 %v249
    %v353 = vunpack.c.h.b16 %v249
    %v354 = vunpack.c.l.b16 %v250
    %v355 = vunpack.c.h.b16 %v250
    %v356 = vunpack.c.l.b16 %v251
    %v357 = vunpack.c.h.b16 %v251
    %v358 = vunpack.c.l.b16 %v252
    %v359 = vunpack.c.h.b16 %v252
    %v360 = vunpack.c.l.b16 %v253
    %v361 = vunpack.c.h.b16 %v253
    %v362 = vpack.c.b16 %v300, %v298
    %v363 = vpack.c.b16 %v301, %v299
    %v364 = vpack.c.b16 %v304, %v302
    %v365 = vpack.c.b16 %v305, %v303
    %v366 = vpack.c.b16 %v308, %v306
    %v367 = vpack.c.b16 %v309, %v307
    %v368 = vpack.c.b16 %v312, %v310
    %v369 = vpack.c.b16 %v313, %v311
    %v370 = vpack.c.b16 %v316, %v314
    %v371 = vpack.c.b16 %v317, %v315
    %v372 = vpack.c.b16 %v320, %v318
    %v373 = vpack.c.b16 %v321, %v319
    %v374 = vpack.c.b16 %v324, %v322
    %v375 = vpack.c.b16 %v325, %v323
    %v376 = vpack.c.b16 %v328, %v326
    %v377 = vpack.c.b16 %v329, %v327
    %v378 = vpack.c.b16 %v332, %v330
    %v379 = vpack.c.b16 %v333, %v331
    %v380 = vpack.c.b16 %v336, %v334
    %v381 = vpack.c.b16 %v337, %v335
    %v382 = vpack.c.b16 %v340, %v338
    %v383 = vpack.c.b16 %v341, %v339
    %v384 = vpack.c.b16 %v344, %v342
    %v385 = vpack.c.b16 %v345, %v343
    %v386 = vpack.c.b16 %v348, %v346
    %v387 = vpack.c.b16 %v349, %v347
    %v388 = vpack.c.b16 %v352, %v350
    %v389 = vpack.c.b16 %v353, %v351
    %v390 = vpack.c.b16 %v356, %v354
    %v391 = vpack.c.b16 %v357, %v355
    %v392 = vpack.c.b16 %v360, %v358
    %v393 = vpack.c.b16 %v361, %v359
    %426 = vmatprep.subr.bf16.mxu0 %v363
    %427 = vmatpush1.bf16.msra.mxu0 %v362
    %428 = vmatprep.subr.bf16.mxu0 %v365
    %429 = vmatpush1.bf16.msra.mxu0 %v364
    %430 = vmatprep.subr.bf16.mxu0 %v367
    %431 = vmatpush1.bf16.msra.mxu0 %v366
    %432 = vmatprep.subr.bf16.mxu0 %v369
    %433 = vmatpush1.bf16.msra.mxu0 %v368
    %434 = vmatprep.subr.bf16.mxu0 %v371
    %435 = vmatpush1.bf16.msra.mxu0 %v370
    %436 = vmatprep.subr.bf16.mxu0 %v373
    %437 = vmatpush1.bf16.msra.mxu0 %v372
    %438 = vmatprep.subr.bf16.mxu0 %v375
    %439 = vmatpush1.bf16.msra.mxu0 %v374
    %440 = vmatprep.subr.bf16.mxu0 %v377
    %441 = vmatpush1.bf16.msra.mxu0 %v376
    %442 = vmatprep.subr.bf16.mxu0 %v379
    %443 = vmatpush1.bf16.msra.mxu0 %v378
    %444 = vmatprep.subr.bf16.mxu0 %v381
    %445 = vmatpush1.bf16.msra.mxu0 %v380
    %446 = vmatprep.subr.bf16.mxu0 %v383
    %447 = vmatpush1.bf16.msra.mxu0 %v382
    %448 = vmatprep.subr.bf16.mxu0 %v385
    %449 = vmatpush1.bf16.msra.mxu0 %v384
    %450 = vmatprep.subr.bf16.mxu0 %v387
    %451 = vmatpush1.bf16.msra.mxu0 %v386
    %452 = vmatprep.subr.bf16.mxu0 %v389
    %453 = vmatpush1.bf16.msra.mxu0 %v388
    %454 = vmatprep.subr.bf16.mxu0 %v391
    %455 = vmatpush1.bf16.msra.mxu0 %v390
    %456 = vmatprep.subr.bf16.mxu0 %v393
    %457 = vmatpush1.bf16.msra.mxu0 %v392
    %458 = vmatprep.mubr.bf16.mxu0 %v221
    %459 = vmatmul.mubr.bf16.gmra.mrb[0].mxu0 %v220
    %v460 = vpop.f32.mrb[0].mxu0
    %v461 = vadd.f32 %v259, %v460
    %v462 = vpop.f32.mrb[0].mxu0
    %v463 = vadd.f32 %v263, %v462
    %v464 = vpop.f32.mrb[0].mxu0
    %v465 = vpop.f32.mrb[0].mxu0
    %466 = vdwg.mxu0
    %v467 = vmax.f32 %v461, 0.0
    %v468 = vmax.f32 %v463, 0.0
    %v469 = vpack.c.bf16 %v467, %v467
    %v470 = vpack.c.bf16 %v468, %v468
    %v471 = vld [vmem:[#allocation6] sm:$0xf]
    %v472 = vld [vmem:[#allocation6 + $0x4] sm:$0xf]
    %v473 = vld [vmem:[#allocation6 + $0x8] sm:$0xf]
    %v474 = vld [vmem:[#allocation6 + $0xc] sm:$0xf]
    %v475 = vld [vmem:[#allocation6 + $0x10] sm:$0xf]
    %v476 = vld [vmem:[#allocation6 + $0x14] sm:$0xf]
    %v477 = vld [vmem:[#allocation6 + $0x18] sm:$0xf]
    %v478 = vld [vmem:[#allocation6 + $0x1c] sm:$0xf]
    %v479 = vld [vmem:[#allocation6 + $0x20] sm:$0xf]
    %v480 = vld [vmem:[#allocation6 + $0x24] sm:$0xf]
    %v481 = vld [vmem:[#allocation6 + $0x28] sm:$0xf]
    %v482 = vld [vmem:[#allocation6 + $0x2c] sm:$0xf]
    %v483 = vld [vmem:[#allocation6 + $0x30] sm:$0xf]
    %v484 = vld [vmem:[#allocation6 + $0x34] sm:$0xf]
    %v485 = vld [vmem:[#allocation6 + $0x38] sm:$0xf]
    %v486 = vld [vmem:[#allocation6 + $0x3c] sm:$0xf]
    %v487 = vld [vmem:[#allocation6 + $0x40] sm:$0xf]
    %v488 = vld [vmem:[#allocation6 + $0x44] sm:$0xf]
    %v489 = vld [vmem:[#allocation6 + $0x48] sm:$0xf]
    %v490 = vld [vmem:[#allocation6 + $0x4c] sm:$0xf]
    %v491 = vld [vmem:[#allocation6 + $0x50] sm:$0xf]
    %v492 = vld [vmem:[#allocation6 + $0x54] sm:$0xf]
    %v493 = vld [vmem:[#allocation6 + $0x58] sm:$0xf]
    %v494 = vld [vmem:[#allocation6 + $0x5c] sm:$0xf]
    %v495 = vld [vmem:[#allocation6 + $0x60] sm:$0xf]
    %v496 = vld [vmem:[#allocation6 + $0x64] sm:$0xf]
    %v497 = vld [vmem:[#allocation6 + $0x68] sm:$0xf]
    %v498 = vld [vmem:[#allocation6 + $0x6c] sm:$0xf]
    %v499 = vld [vmem:[#allocation6 + $0x70] sm:$0xf]
    %v500 = vld [vmem:[#allocation6 + $0x74] sm:$0xf]
    %v501 = vld [vmem:[#allocation6 + $0x78] sm:$0xf]
    %v502 = vld [vmem:[#allocation6 + $0x7c] sm:$0xf]
    %v503 = vld [vmem:[%s6] sm:$0x1]
    %v505 = vlaneseq
    %v506 = vshrl.u32 %v505, 7
    %v507 = vsub.s32 0, %v506
    %v508 = vrot.slane %v503, %v507
    %v542 = vunpack.c.l.b16 %v471
    %v543 = vunpack.c.l.b16 %v472
    %v544 = vunpack.c.l.b16 %v473
    %v545 = vunpack.c.l.b16 %v474
    %v546 = vunpack.c.l.b16 %v475
    %v547 = vunpack.c.l.b16 %v476
    %v548 = vunpack.c.l.b16 %v477
    %v549 = vunpack.c.l.b16 %v478
    %v550 = vunpack.c.l.b16 %v479
    %v551 = vunpack.c.l.b16 %v480
    %v552 = vunpack.c.l.b16 %v481
    %v553 = vunpack.c.l.b16 %v482
    %v554 = vunpack.c.l.b16 %v483
    %v555 = vunpack.c.l.b16 %v484
    %v556 = vunpack.c.l.b16 %v485
    %v557 = vunpack.c.l.b16 %v486
    %v558 = vunpack.c.l.b16 %v487
    %v559 = vunpack.c.l.b16 %v488
    %v560 = vunpack.c.l.b16 %v489
    %v561 = vunpack.c.l.b16 %v490
    %v562 = vunpack.c.l.b16 %v491
    %v563 = vunpack.c.l.b16 %v492
    %v564 = vunpack.c.l.b16 %v493
    %v565 = vunpack.c.l.b16 %v494
    %v566 = vunpack.c.l.b16 %v495
    %v567 = vunpack.c.l.b16 %v496
    %v568 = vunpack.c.l.b16 %v497
    %v569 = vunpack.c.l.b16 %v498
    %v570 = vunpack.c.l.b16 %v499
    %v571 = vunpack.c.l.b16 %v500
    %v572 = vunpack.c.l.b16 %v501
    %v573 = vunpack.c.l.b16 %v502
    %v574 = vpack.c.b16 %v543, %v542
    %v575 = vpack.c.b16 %v545, %v544
    %v576 = vpack.c.b16 %v547, %v546
    %v577 = vpack.c.b16 %v549, %v548
    %v578 = vpack.c.b16 %v551, %v550
    %v579 = vpack.c.b16 %v553, %v552
    %v580 = vpack.c.b16 %v555, %v554
    %v581 = vpack.c.b16 %v557, %v556
    %v582 = vpack.c.b16 %v559, %v558
    %v583 = vpack.c.b16 %v561, %v560
    %v584 = vpack.c.b16 %v563, %v562
    %v585 = vpack.c.b16 %v565, %v564
    %v586 = vpack.c.b16 %v567, %v566
    %v587 = vpack.c.b16 %v569, %v568
    %v588 = vpack.c.b16 %v571, %v570
    %v589 = vpack.c.b16 %v573, %v572
    %606 = vmatprep.subr.bf16.mxu0 0
    %607 = vmatpush1.bf16.msra.mxu0 %v574
    %608 = vmatprep.subr.bf16.mxu0 0
    %609 = vmatpush1.bf16.msra.mxu0 %v575
    %610 = vmatprep.subr.bf16.mxu0 0
    %611 = vmatpush1.bf16.msra.mxu0 %v576
    %612 = vmatprep.subr.bf16.mxu0 0
    %613 = vmatpush1.bf16.msra.mxu0 %v577
    %614 = vmatprep.subr.bf16.mxu0 0
    %615 = vmatpush1.bf16.msra.mxu0 %v578
    %616 = vmatprep.subr.bf16.mxu0 0
    %617 = vmatpush1.bf16.msra.mxu0 %v579
    %618 = vmatprep.subr.bf16.mxu0 0
    %619 = vmatpush1.bf16.msra.mxu0 %v580
    %620 = vmatprep.subr.bf16.mxu0 0
    %621 = vmatpush1.bf16.msra.mxu0 %v581
    %622 = vmatprep.subr.bf16.mxu0 0
    %623 = vmatpush1.bf16.msra.mxu0 %v582
    %624 = vmatprep.subr.bf16.mxu0 0
    %625 = vmatpush1.bf16.msra.mxu0 %v583
    %626 = vmatprep.subr.bf16.mxu0 0
    %627 = vmatpush1.bf16.msra.mxu0 %v584
    %628 = vmatprep.subr.bf16.mxu0 0
    %629 = vmatpush1.bf16.msra.mxu0 %v585
    %630 = vmatprep.subr.bf16.mxu0 0
    %631 = vmatpush1.bf16.msra.mxu0 %v586
    %632 = vmatprep.subr.bf16.mxu0 0
    %633 = vmatpush1.bf16.msra.mxu0 %v587
    %634 = vmatprep.subr.bf16.mxu0 0
    %635 = vmatpush1.bf16.msra.mxu0 %v588
    %636 = vmatprep.subr.bf16.mxu0 0
    %637 = vmatpush1.bf16.msra.mxu0 %v589
    %638 = vmatprep.mubr.bf16.mxu0 %v470
    %639 = vmatmul.mubr.bf16.gmra.mrb[0].mxu0 %v469
    %v640 = vpop.f32.mrb[0].mxu0
    %v641 = vadd.f32 %v508, %v640
    %v642 = vpop.f32.mrb[0].mxu0
    %v643 = vpop.f32.mrb[0].mxu0
    %v644 = vpop.f32.mrb[0].mxu0
    %645 = vdwg.mxu0
    %646 = vst [vmem:[%s7] sm:$0xff] %v641
    // Predicated region
    $region42: #{binary_classification_forward.1} parent=1 // pred_check
      _
    $region43: #{binary_classification_forward.1} parent=1 // pred_check_branch
      %648 = sbr.rel (0) target = $region45
    $region44: #{binary_classification_forward.1} parent=1 // pred_region
      _
    $region45: #{binary_classification_forward.1} parent=1 // pred_fallthru
      _
    // Predicated region
    $region46: #{binary_classification_forward.1} parent=1 // pred_check
      _
    $region47: #{binary_classification_forward.1} parent=1 // pred_check_branch
      %650 = sbr.rel (0) target = $region49
    $region48: #{binary_classification_forward.1} parent=1 // pred_region
      _
    $region49: #{binary_classification_forward.1} parent=1 // pred_fallthru
      _
    %651 = vsyncpa [#allocation3], 1
    %652 = vsyncpa [#allocation5], 1

</llo_original>
